<compile_context>
chip_gen: v7x
topology: tpu7x:2x2x1
jax: 0.10.0
libtpu: 0.0.40
codegen_flags: <defaults>
</compile_context>

<pallas_src>
import jax
import jax.numpy as jnp
from jax.experimental import pallas as pl
from jax.experimental.pallas import tpu as pltpu


def _binary_tanh_kernel(x_ref, o_ref):
    x = x_ref[...]
    one = jnp.array(1, dtype=o_ref.dtype)
    neg_one = jnp.array(-1, dtype=o_ref.dtype)
    # hardtanh(x) >= 0  <=>  x >= 0, so the clamp is folded away.
    o_ref[...] = jnp.where(x >= 0, one, neg_one)


def _binarize_jnp(x: jax.Array) -> jax.Array:
    """Pure-XLA fallback (small / ragged inputs). Same semantics as the kernel."""
    one = jnp.array(1, dtype=x.dtype)
    neg_one = jnp.array(-1, dtype=x.dtype)
    return jnp.where(x >= 0, one, neg_one)


def _vmem_capacity_bytes() -> int:
    try:
        return int(pltpu.get_tpu_info().vmem_capacity_bytes)
    except Exception:
        return 64 * 1024 * 1024  # conservative fallback (v7x per-TensorCore VMEM)


def binary_tanh(
    x: jax.Array,
    *,
    target_block_bytes: int = 4 * 1024 * 1024,
    min_pallas_bytes: int = 1 * 1024 * 1024,
) -> jax.Array:
    """Elementwise BinaryTanh. Any shape / float dtype; returns same shape/dtype."""
    orig_shape = x.shape
    dtype = x.dtype
    itemsize = jnp.dtype(dtype).itemsize
    n = x.size

    # Small-input fast path: pallas_call launch + pipeline prologue dominate
    # below ~1 MiB, and a fused XLA select avoids a standalone HBM round-trip.
    if n == 0 or n * itemsize < min_pallas_bytes:
        return _binarize_jnp(x)

    # Lane-dense 2D view: pick the widest lane width dividing the element
    # count (zero-copy reshape of a contiguous array).
    lane = None
    for cand in (1024, 512, 256, 128):
        if n % cand == 0:
            lane = cand
            break
    if lane is None:
        # Ragged element count: padding (concatenate) + trailing slice would
        # add full-array HBM copies (2n -> ~4-6n bytes). For a memory-bound
        # elementwise op the fused XLA select is already at the HBM roofline,
        # so just fall back.
        return _binarize_jnp(x)

    rows = n // lane
    x2d = x.reshape(rows, lane)

    # Block sizing: ~4 MiB blocks, capped so the double-buffered in+out
    # working set (4 * block_bytes) stays comfortably inside scoped VMEM on
    # every generation (v7x: 64 MiB physical per TensorCore).
    vmem_cap = _vmem_capacity_bytes()
    block_bytes = min(target_block_bytes, vmem_cap // 8)
    block_rows = max(8, (block_bytes // (lane * itemsize)) // 8 * 8)
    # Keep >= 2 grid steps when possible so the "parallel" axis can shard
    # across both v7x TensorCores (per-step overhead ~0.35 us is negligible
    # on single-TC v5e/v6e).
    block_rows = min(block_rows, max(8, (pl.cdiv(rows, 2) + 7) // 8 * 8))
    # Full-dim block when rows < 8 (full array extent is always legal).
    block_rows = min(block_rows, rows)

    grid = (pl.cdiv(rows, block_rows),)

    cost = pl.CostEstimate(
        flops=2 * n,                      # one compare + one select per element
        transcendentals=0,
        bytes_accessed=2 * n * itemsize,  # 1 read + 1 write (no padding path)
    )

    out2d = pl.pallas_call(
        _binary_tanh_kernel,
        out_shape=jax.ShapeDtypeStruct((rows, lane), dtype),
        grid_spec=pltpu.PrefetchScalarGridSpec(
            num_scalar_prefetch=0,
            grid=grid,
            in_specs=[pl.BlockSpec((block_rows, lane), lambda i: (i, 0))],
            out_specs=pl.BlockSpec((block_rows, lane), lambda i: (i, 0)),
        ),
        compiler_params=pltpu.CompilerParams(
            dimension_semantics=("parallel",),
            vmem_limit_bytes=min(vmem_cap // 2, 64 * 1024 * 1024),
        ),
        cost_estimate=cost,
    )(x2d)

    return out2d.reshape(orig_shape)


if __name__ == "__main__":
    key = jax.random.PRNGKey(0)
    k0, k1, k2 = jax.random.split(key, 3)

    def ref_fn(a):
        return jnp.where(jnp.clip(a, -1.0, 1.0) >= 0, 1.0, -1.0).astype(a.dtype)

    # 1) Small NCHW activation (matches the module's MNIST-conv scale):
    #    goes through the small-input fast path.
    x_small = jax.random.normal(k0, (2, 4, 16, 16), dtype=jnp.float32) * 2.0
    y_small = jax.block_until_ready(binary_tanh(x_small))
    assert y_small.shape == x_small.shape and y_small.dtype == x_small.dtype
    assert bool(jnp.all(y_small == ref_fn(x_small)))

    # 1b) Same small input forced through the Pallas kernel path.
    y_small_k = jax.block_until_ready(binary_tanh(x_small, min_pallas_bytes=0))
    assert y_small_k.shape == x_small.shape and y_small_k.dtype == x_small.dtype
    assert bool(jnp.all(y_small_k == ref_fn(x_small)))

    # 2) Larger aligned activation: exercises the pipelined kernel with >= 2
    #    grid steps (so both v7x TensorCores participate).
    x_big = jax.random.normal(k1, (4, 32, 64, 64), dtype=jnp.float32) * 2.0
    y_big = jax.block_until_ready(binary_tanh(x_big))
    assert y_big.shape == x_big.shape and y_big.dtype == x_big.dtype
    assert bool(jnp.all(y_big == ref_fn(x_big)))

    # 3) Ragged shape (element count not a multiple of 128): copy-free jnp
    #    fallback path.
    x_rag = jax.random.normal(k2, (3, 5, 7, 11), dtype=jnp.float32)
    y_rag = jax.block_until_ready(binary_tanh(x_rag))
    assert y_rag.shape == x_rag.shape and y_rag.dtype == x_rag.dtype
    assert bool(jnp.all(y_rag == ref_fn(x_rag)))

    print("KERNEL_OK")
</pallas_src>

<mosaic_0001>
module attributes {stable_mosaic.version = 11 : i64} {
  func.func @_binary_tanh_kernel(%arg0: i32, %arg1: memref<2x1024xf32, #tpu.memory_space<vmem>>, %arg2: memref<2x1024xf32, #tpu.memory_space<vmem>>) attributes {dimension_semantics = [#tpu.dimension_semantics<parallel>], iteration_bounds = array<i64: 1>, scalar_prefetch = 0 : i64, scratch_operands = 0 : i64, tpu.core_type = #tpu.core_type<tc>, window_params = [{transform_indices = @transform_0, window_bounds = array<i64: 2, 1024>}, {transform_indices = @transform_1, window_bounds = array<i64: 2, 1024>}]} {
    %c0 = arith.constant 0 : index
    %c0_0 = arith.constant 0 : index
    %0 = vector.load %arg1[%c0, %c0_0] : memref<2x1024xf32, #tpu.memory_space<vmem>>, vector<2x1024xf32>
    %cst = arith.constant 0.000000e+00 : f32
    %1 = vector.broadcast %cst : f32 to vector<2x1024xf32>
    %2 = arith.cmpf oge, %0, %1 : vector<2x1024xf32>
    %cst_1 = arith.constant 1.000000e+00 : f32
    %cst_2 = arith.constant -1.000000e+00 : f32
    %3 = vector.broadcast %cst_1 : f32 to vector<2x1024xf32>
    %4 = vector.broadcast %cst_2 : f32 to vector<2x1024xf32>
    %5 = arith.select %2, %3, %4 : vector<2x1024xi1>, vector<2x1024xf32>
    %c0_3 = arith.constant 0 : index
    %c0_4 = arith.constant 0 : index
    %6 = vector.load %arg2[%c0_3, %c0_4] : memref<2x1024xf32, #tpu.memory_space<vmem>>, vector<2x1024xf32>
    tpu.vector_store %arg2[%c0_3, %c0_4], %5 {strides = array<i32>} : memref<2x1024xf32, #tpu.memory_space<vmem>>, vector<2x1024xf32>,
    return
  }
  func.func @transform_0(%arg0: i32) -> (i32, i32) {
    %c0_i32 = arith.constant 0 : i32
    %c0_i32_0 = arith.constant 0 : i32
    return %arg0, %c0_i32 : i32, i32
  }
  func.func @transform_1(%arg0: i32) -> (i32, i32) {
    %c0_i32 = arith.constant 0 : i32
    %c0_i32_0 = arith.constant 0 : i32
    return %arg0, %c0_i32 : i32, i32
  }
}

</mosaic_0001>

<llo_original>
// kernel: tpu_custom_call.1
$region0: #{tpu_custom_call.1}
  #allocation0 [shape = 'u32[]', space=smem, size = 0x4, offset = 0x4, fixed_abs, tag = 'smem constant byte address 0x4 - core index']
  #allocation1 [shape = 'u32[144,128]{1,0:T(1,128)}', space=vmem, size = 0x12000, scoped, tag = 'internal scratch']
  %s0 = inlined_call_operand.hbm [shape: f32[2,1024], index: 0, kind: input, shape index: {}]
  %s1 = inlined_call_operand.hbm [shape: f32[2,1024], index: 1, kind: output, shape index: {}]
  %s2 = sld [smem:[#allocation0]]
  $region18: #{tpu_custom_call.1} parent=0
    _
  %s4 = ssub.s32 1, %s2
  %s5 = scalar_select 0, %s4, %s2
  $region1: #{tpu_custom_call.1} parent=0
    #allocation2 [shape = 'u8[8192]{0}', space=vmem, size = 0x2000, scoped, tag = 'input window, operand 0, single buffered']
    #allocation3 [shape = 's32[1]{0}', space=sflag, size = 0x4, scoped, tag = 'scoped memory for tpu_custom_call.1']
    #allocation4 [shape = 's32[1]{0}', space=sflag, size = 0x4, scoped, tag = 'scoped memory for tpu_custom_call.1']
    #allocation5 [shape = 'u8[8192]{0}', space=vmem, size = 0x2000, scoped, tag = 'output window, operand 0, single buffered']
    %6 = vsyncpa [#allocation3], 0
    %7 = vsyncpa [#allocation4], 0
    // Predicated region
    $region2: #{tpu_custom_call.1} parent=1 // pred_check
      _
    $region3: #{tpu_custom_call.1} parent=1 // pred_check_branch
      %9 = sbr.rel (0) target = $region5
    $region4: #{tpu_custom_call.1} parent=1 // pred_region
      %s11 = ssub.s32 256, 256
      %12 = vsyncadd [#allocation3], %s11
      %s14 = sshll.u32 [#allocation2], 4
      %s15 = int_to_ptr.vmem [resolvable:$true] %s14
      %17 = dma.hbm_to_vmem [thread:$0]  %s0, 256, %s15, [#allocation3]
    $region5: #{tpu_custom_call.1} parent=1 // pred_fallthru
      _
    // Predicated region
    $region6: #{tpu_custom_call.1} parent=1 // pred_check
      _
    $region7: #{tpu_custom_call.1} parent=1 // pred_check_branch
      %19 = sbr.rel (0) target = $region9
    $region8: #{tpu_custom_call.1} parent=1 // pred_region
      %20 = dma.done [#allocation3], 256
    $region9: #{tpu_custom_call.1} parent=1 // pred_fallthru
      _
    %v21 = vld [vmem:[#allocation2] sm:$0xff]
    %v22 = vld [vmem:[#allocation2 + $0x8] sm:$0xff]
    %vm23 = vcmp.ge.f32.partialorder %v21, 0.0
    %vm24 = vcmp.ge.f32.partialorder %v22, 0.0
    %v25 = vsel %vm23, 1.0, -1.0
    %v26 = vsel %vm24, 1.0, -1.0
    %27 = vst [vmem:[#allocation5] sm:$0xff] %v25
    %28 = vst [vmem:[#allocation5 + $0x8] sm:$0xff] %v26
    // Predicated region
    $region10: #{tpu_custom_call.1} parent=1 // pred_check
      _
    $region11: #{tpu_custom_call.1} parent=1 // pred_check_branch
      %30 = sbr.rel (0) target = $region13
    $region12: #{tpu_custom_call.1} parent=1 // pred_region
      %s32 = ssub.s32 256, 256
      %33 = vsyncadd [#allocation4], %s32
      %s35 = sshll.u32 [#allocation5], 4
      %s36 = int_to_ptr.vmem [resolvable:$true] %s35
      %38 = dma.vmem_to_hbm [thread:$0]  %s36, 256, %s1, [#allocation4]
    $region13: #{tpu_custom_call.1} parent=1 // pred_fallthru
      _
    // Predicated region
    $region14: #{tpu_custom_call.1} parent=1 // pred_check
      _
    $region15: #{tpu_custom_call.1} parent=1 // pred_check_branch
      %40 = sbr.rel (0) target = $region17
    $region16: #{tpu_custom_call.1} parent=1 // pred_region
      %41 = dma.done [#allocation4], 256
    $region17: #{tpu_custom_call.1} parent=1 // pred_fallthru
      _
    %42 = vsyncpa [#allocation3], 1
    %43 = vsyncpa [#allocation4], 1

</llo_original>
